<compile_context>
chip_gen: v5e
topology: v5e:2x2
jax: 0.10.0
libtpu: 0.0.40
codegen_flags: <defaults>
</compile_context>

<pallas_src>
import functools

import jax
import jax.numpy as jnp
import numpy as np
from jax.experimental import pallas as pl
from jax.experimental.pallas import tpu as pltpu


def _round_up(x, n):
    return ((x + n - 1) // n) * n


def _cdiv(a, b):
    return -(-a // b)


def _tpu_device_kind():
    try:
        return jax.devices()[0].device_kind.lower()
    except Exception:  # no device info / interpret mode
        return ""


def _num_tensorcores(kind):
    # v7x exposes 2 TensorCores per chip; v5e / v6e have 1.
    return 2 if "v7" in kind else 1


def resblock_kernel(x_ref, w_ref, b_ref, o_ref, *, compute_dtype):
    """One row tile of LeakyReLU(0.2)( x @ W_comb + b_comb ) in lane-packed layout."""
    x = x_ref[...]
    if compute_dtype is not None and x.dtype != compute_dtype:
        # Cast at the MXU input (VPU slot has slack), NOT in the wrapper:
        # avoids an extra full HBM pass over x for this memory-bound op.
        x = x.astype(compute_dtype)
    acc = jnp.dot(x, w_ref[...], preferred_element_type=jnp.float32)
    s = acc + b_ref[...]                                    # (tm_k, dout_k) f32
    o_ref[...] = jnp.maximum(s, 0.2 * s).astype(o_ref.dtype)  # LeakyReLU(0.2)


def resblock(x, w_seq, b_seq, w_skip, b_skip, *, tm=None, compute_dtype=None,
             out_dtype=None):
    """x: (..., D_in) -> (..., D_out).  Fused seq+skip Linear + LeakyReLU(0.2).

    Weights are stored (D_in, D_out), i.e. transposed vs. PyTorch nn.Linear.
    """
    orig_shape = x.shape
    d_in = orig_shape[-1]
    d_out = w_seq.shape[1]
    out_dtype = x.dtype if out_dtype is None else out_dtype

    kind = _tpu_device_kind()

    # (1) Fuse the two Linears that consume the same input (tiny, constant-shape).
    w_comb = w_seq + w_skip                                 # (D_in, D_out)
    b_comb = (b_seq + b_skip).astype(jnp.float32)           # (D_out,)

    x2 = x.reshape(-1, d_in)                                # (M, D_in)
    m = x2.shape[0]

    # (2) Lane packing: fold `pack` independent rows into the 128-lane axis so
    #     loads / matmuls / stores run on full 128-lane vregs.  Reshapes are
    #     free (row-major); the block-diagonal weight is built once (tiny).
    pack = 1
    if 0 < d_in < 128 and 0 < d_out < 128 and 128 % d_in == 0 and 128 % d_out == 0:
        pack = 128 // max(d_in, d_out)
    if pack > 1:
        w_k = jnp.kron(jnp.eye(pack, dtype=w_comb.dtype), w_comb)  # block-diag
        b_k = jnp.tile(b_comb, pack)
    else:
        w_k, b_k = w_comb, b_comb
    din_k = pack * d_in
    dout_k = pack * d_out
    b_k = b_k.reshape(1, dout_k)
    if compute_dtype is not None:
        w_k = w_k.astype(compute_dtype)                     # tiny resident weight

    # (3) Pad rows only to a multiple of `pack` (free-reshape requirement; a
    #     no-op for the common even-M case).  Tiny inputs are lifted to >= 8
    #     packed rows (one sublane tile) — negligible at that size.
    pad_rows = (-m) % pack
    m_k = (m + pad_rows) // pack
    if m_k < 8:
        pad_rows += (8 - m_k) * pack
        m_k = 8
    if pad_rows:
        x2 = jnp.pad(x2, ((0, pad_rows), (0, 0)))
    x_k = x2.reshape(m_k, din_k)                            # free (row-major)

    # (4) Row-tile selection (in packed rows).
    if tm is None:
        tm = 4096 if "v7" in kind else 2048                 # amortize ~0.35us/step
    tm_k = _round_up(max(int(tm), 8), 8)
    # Keep double-buffered (x + out) blocks comfortably inside scoped VMEM.
    row_bytes = din_k * x2.dtype.itemsize + dout_k * np.dtype(out_dtype).itemsize
    tm_k = min(tm_k, max(8, ((6 * 1024 * 1024) // row_bytes) // 8 * 8))
    tm_k = min(tm_k, (m_k // 8) * 8)                        # block never exceeds array
    # Split a fits-in-one-tile workload only on 2-TC parts (v7x) and only when
    # each half is big enough to amortize the extra grid step.
    if _num_tensorcores(kind) >= 2 and _cdiv(m_k, tm_k) == 1 and m_k >= 1024:
        tm_k = min(tm_k, _round_up(_cdiv(m_k, 2), 8))

    grid = (_cdiv(m_k, tm_k),)                              # partial last block masked by Pallas

    out = pl.pallas_call(
        functools.partial(resblock_kernel, compute_dtype=compute_dtype),
        out_shape=jax.ShapeDtypeStruct((m_k, dout_k), out_dtype),
        grid_spec=pltpu.PrefetchScalarGridSpec(
            num_scalar_prefetch=0,
            grid=grid,
            in_specs=[
                pl.BlockSpec((tm_k, din_k), lambda i: (i, 0)),    # packed x row tile
                pl.BlockSpec((din_k, dout_k), lambda i: (0, 0)),  # fused block-diag weight (resident)
                pl.BlockSpec((1, dout_k), lambda i: (0, 0)),      # fused bias (resident)
            ],
            out_specs=pl.BlockSpec((tm_k, dout_k), lambda i: (i, 0)),
        ),
        compiler_params=pltpu.CompilerParams(
            dimension_semantics=("parallel",)),
    )(x_k, w_k, b_k)

    y = out.reshape(m_k * pack, d_out)[:m]                  # free reshape + drop pad
    return y.reshape(orig_shape[:-1] + (d_out,))


def reference(x, w_seq, b_seq, w_skip, b_skip):
    s = x @ w_seq + b_seq + x @ w_skip + b_skip
    return jnp.where(s >= 0, s, 0.2 * s)


if __name__ == "__main__":
    # Small shapes implied by the module: Linear acting on a hidden vector per token.
    batch, seq_len, hidden = 2, 8, 32                       # x: (2, 8, 32)
    key = jax.random.PRNGKey(0)
    kx, k1, k2, k3, k4 = jax.random.split(key, 5)

    x = jax.random.normal(kx, (batch, seq_len, hidden), dtype=jnp.float32)
    # Deterministic synthetic parameters (no checkpoint load); weights stored
    # (D_in, D_out), i.e. transposed vs. PyTorch nn.Linear's (out, in).
    w_seq = jax.random.normal(k1, (hidden, hidden), dtype=jnp.float32) * 0.05
    b_seq = jax.random.normal(k2, (hidden,), dtype=jnp.float32) * 0.05
    w_skip = jax.random.normal(k3, (hidden, hidden), dtype=jnp.float32) * 0.05
    b_skip = jax.random.normal(k4, (hidden,), dtype=jnp.float32) * 0.05

    ref = reference(x, w_seq, b_seq, w_skip, b_skip)

    # One jit around the whole wrapper: weight prep fuses into the same dispatch.
    fwd = jax.jit(resblock, static_argnames=("tm", "compute_dtype", "out_dtype"))

    # f32 path
    out = jax.block_until_ready(fwd(x, w_seq, b_seq, w_skip, b_skip))
    assert out.shape == ref.shape
    assert jnp.allclose(out, ref, atol=1e-5, rtol=1e-5), "mismatch vs reference (f32)"

    # ragged row count — exercises the minimal pack-padding path
    x_r = jax.random.normal(kx, (3, 7, hidden), dtype=jnp.float32)
    out_r = jax.block_until_ready(fwd(x_r, w_seq, b_seq, w_skip, b_skip))
    ref_r = reference(x_r, w_seq, b_seq, w_skip, b_skip)
    assert jnp.allclose(out_r, ref_r, atol=1e-5, rtol=1e-5), "mismatch vs reference (ragged)"

    # partial last block (grid > 1, no full-tile padding) with a tiny tile
    x_p = jax.random.normal(kx, (5, 9, hidden), dtype=jnp.float32)  # 45 rows -> 12 packed rows
    out_p = jax.block_until_ready(fwd(x_p, w_seq, b_seq, w_skip, b_skip, tm=8))
    ref_p = reference(x_p, w_seq, b_seq, w_skip, b_skip)
    assert jnp.allclose(out_p, ref_p, atol=1e-5, rtol=1e-5), "mismatch vs reference (partial block)"

    # bf16 operands / f32 accumulation (cast inside kernel; v6e / v7x MXU path)
    out_bf = jax.block_until_ready(
        fwd(x, w_seq, b_seq, w_skip, b_skip, compute_dtype=jnp.bfloat16))
    assert jnp.allclose(out_bf, ref, atol=5e-2, rtol=5e-2), "mismatch vs reference (bf16 compute)"

    # bf16 output path (halves store-side HBM traffic for downstream bf16 consumers)
    out_bo = jax.block_until_ready(
        fwd(x, w_seq, b_seq, w_skip, b_skip, out_dtype=jnp.bfloat16))
    assert out_bo.dtype == jnp.bfloat16
    assert jnp.allclose(out_bo.astype(jnp.float32), ref, atol=5e-2, rtol=5e-2), \
        "mismatch vs reference (bf16 output)"

    print("KERNEL_OK")
</pallas_src>

<mosaic_0001>
module attributes {stable_mosaic.version = 11 : i64} {
  func.func @resblock_kernel(%arg0: i32, %arg1: memref<8x128xf32, #tpu.memory_space<vmem>>, %arg2: memref<128x128xf32, #tpu.memory_space<vmem>>, %arg3: memref<1x128xf32, #tpu.memory_space<vmem>>, %arg4: memref<8x128xf32, #tpu.memory_space<vmem>>) attributes {dimension_semantics = [#tpu.dimension_semantics<parallel>], iteration_bounds = array<i64: 1>, scalar_prefetch = 0 : i64, scratch_operands = 0 : i64, tpu.core_type = #tpu.core_type<tc>, window_params = [{transform_indices = @transform_0, window_bounds = array<i64: 8, 128>}, {pipeline_mode = #tpu.pipeline_mode<synchronous>, transform_indices = @transform_1, window_bounds = array<i64: 128, 128>}, {pipeline_mode = #tpu.pipeline_mode<synchronous>, transform_indices = @transform_2, window_bounds = array<i64: 1, 128>}, {transform_indices = @transform_3, window_bounds = array<i64: 8, 128>}]} {
    %c0 = arith.constant 0 : index
    %c0_0 = arith.constant 0 : index
    %0 = vector.load %arg1[%c0, %c0_0] : memref<8x128xf32, #tpu.memory_space<vmem>>, vector<8x128xf32>
    %c0_1 = arith.constant 0 : index
    %c0_2 = arith.constant 0 : index
    %1 = vector.load %arg2[%c0_1, %c0_2] : memref<128x128xf32, #tpu.memory_space<vmem>>, vector<128x128xf32>
    %cst = arith.constant dense<0.000000e+00> : vector<8x128xf32>
    %2 = tpu.matmul %0, %1, %cst {dimension_numbers = #tpu.dot_dimension_numbers<[1], [0], [0], [1], [0, 0, 1, 1], [], []>} : vector<8x128xf32>, vector<128x128xf32>, vector<8x128xf32> -> vector<8x128xf32>
    %c0_3 = arith.constant 0 : index
    %c0_4 = arith.constant 0 : index
    %3 = vector.load %arg3[%c0_3, %c0_4] : memref<1x128xf32, #tpu.memory_space<vmem>>, vector<1x128xf32>
    %4 = vector.broadcast %3 : vector<1x128xf32> to vector<8x128xf32>
    %5 = arith.addf %2, %4 : vector<8x128xf32>
    %cst_5 = arith.constant 2.000000e-01 : f32
    %6 = vector.broadcast %cst_5 : f32 to vector<8x128xf32>
    %7 = arith.mulf %6, %5 : vector<8x128xf32>
    %8 = arith.maximumf %5, %7 : vector<8x128xf32>
    %c0_6 = arith.constant 0 : index
    %c0_7 = arith.constant 0 : index
    %9 = vector.load %arg4[%c0_6, %c0_7] : memref<8x128xf32, #tpu.memory_space<vmem>>, vector<8x128xf32>
    tpu.vector_store %arg4[%c0_6, %c0_7], %8 {strides = array<i32>} : memref<8x128xf32, #tpu.memory_space<vmem>>, vector<8x128xf32>,
    return
  }
  func.func @transform_0(%arg0: i32) -> (i32, i32) {
    %c0_i32 = arith.constant 0 : i32
    %c0_i32_0 = arith.constant 0 : i32
    return %arg0, %c0_i32 : i32, i32
  }
  func.func @transform_1(%arg0: i32) -> (i32, i32) {
    %c0_i32 = arith.constant 0 : i32
    %c0_i32_0 = arith.constant 0 : i32
    %c0_i32_1 = arith.constant 0 : i32
    return %c0_i32, %c0_i32_0 : i32, i32
  }
  func.func @transform_2(%arg0: i32) -> (i32, i32) {
    %c0_i32 = arith.constant 0 : i32
    %c0_i32_0 = arith.constant 0 : i32
    %c0_i32_1 = arith.constant 0 : i32
    return %c0_i32, %c0_i32_0 : i32, i32
  }
  func.func @transform_3(%arg0: i32) -> (i32, i32) {
    %c0_i32 = arith.constant 0 : i32
    %c0_i32_0 = arith.constant 0 : i32
    return %arg0, %c0_i32 : i32, i32
  }
}

</mosaic_0001>

<llo_original>
// kernel: tile.8
$region0: #{tile.8}
  #allocation0 [shape = 's32[1]{0}', space=sflag, size = 0x4, scoped, tag = 'scoped memory for tile.8']
  %s0 = inlined_call_operand.vmem [shape: f32[32], index: 0, kind: input, shape index: {}]
  %s1 = inlined_call_operand.vmem [shape: f32[4,32], index: 1, kind: output, shape index: {}]
  // Predicated region
  $region2: #{tile.8} parent=0 // pred_check
    _
  $region3: #{tile.8} parent=0 // pred_check_branch
    %3 = sbr.rel (0) target = $region5
  $region4: #{tile.8} parent=0 // pred_region
    _
  $region5: #{tile.8} parent=0 // pred_fallthru
    _
  %v4 = vld [vmem:[%s0] ss:$0 sm:$0xff]
  %5 = vst [vmem:[%s1] sm:$0xf] %v4

// kernel: tile.9
$region0: #{tile.9}
  %s0 = inlined_call_operand.vmem [shape: f32[4,32], index: 0, kind: input, shape index: {}]
  %s1 = inlined_call_operand.vmem [shape: f32[1,128], index: 1, kind: output, shape index: {}]
  $region1: #{tile.9} parent=0
    #allocation0 [shape = 'u8[4096]{0}', space=vmem, size = 0x1000, scoped, tag = 'scoped mem for output reshape']
    #allocation1 [shape = 'u8[4096]{0}', space=vmem, size = 0x1000, scoped, tag = 'scoped mem for input reshape']
    %s3 = ssub.s32 16, 1
    %v4 = vld [vmem:[%s0] sm:%s3]
    %5 = vst [vmem:[#allocation1] sm:%s3] %v4
    %v6 = vld [vmem:[#allocation1] sm:$0x1]
    %vm7 = vcmask 261120
    %8 = vst.msk [vmem:[#allocation0] sm:$0x1] %vm7, %v6
    %s9 = scalar_lea.vmem [#allocation1], 3
    %v10 = vld [vmem:[%s9] sm:$0x1]
    %11 = vrot.lane.b32.xlu0 %v10, 96
    %v12 = vpop.permute.xlu0 %11
    %vm13 = vcmask 1048320
    %14 = vst.msk [vmem:[#allocation0] sm:$0x1] %vm13, %v12
    %s15 = scalar_lea.vmem [#allocation1], 2
    %v16 = vld [vmem:[%s15] sm:$0x1]
    %17 = vrot.lane.b32.xlu0 %v16, 64
    %v18 = vpop.permute.xlu0 %17
    %vm19 = vcmask 785920
    %20 = vst.msk [vmem:[#allocation0] sm:$0x1] %vm19, %v18
    %s21 = scalar_lea.vmem [#allocation1], 1
    %v22 = vld [vmem:[%s21] sm:$0x1]
    %23 = vrot.lane.b32.xlu0 %v22, 32
    %v24 = vpop.permute.xlu0 %23
    %vm25 = vcmask 523520
    %26 = vst.msk [vmem:[#allocation0] sm:$0x1] %vm25, %v24
    %s28 = ssub.s32 2, 1
    %v29 = vld [vmem:[#allocation0] sm:%s28]
    %s31 = ssub.s32 2, 1
    %32 = vst [vmem:[%s1] sm:%s31] %v29

// kernel: resblock.1
$region0: #{resblock.1}
  #allocation0 [shape = 'u32[]', space=smem, size = 0x4, offset = 0x4, fixed_abs, tag = 'smem constant byte address 0x4 - core index']
  #allocation1 [shape = 'u32[72,128]{1,0:T(1,128)}', space=vmem, size = 0x9000, scoped, tag = 'internal scratch']
  %s0 = inlined_call_operand.vmem [shape: f32[8,128], index: 0, kind: input, shape index: {}]
  %s1 = inlined_call_operand.vmem [shape: f32[128,128], index: 1, kind: input, shape index: {}]
  %s2 = inlined_call_operand.vmem [shape: f32[1,128], index: 2, kind: input, shape index: {}]
  %s3 = inlined_call_operand.vmem [shape: f32[8,128], index: 3, kind: output, shape index: {}]
  %s4 = sld [smem:[#allocation0]]
  $region22: #{resblock.1} parent=0
    _
  %s6 = ssub.s32 1, %s4
  %s7 = scalar_select 0, %s6, %s4
  // Predicated region
  $region2: #{resblock.1} parent=0 // pred_check
    _
  $region3: #{resblock.1} parent=0 // pred_check_branch
    %9 = sbr.rel (0) target = $region5
  $region4: #{resblock.1} parent=0 // pred_region
    _
  $region5: #{resblock.1} parent=0 // pred_fallthru
    _
  // Predicated region
  $region6: #{resblock.1} parent=0 // pred_check
    _
  $region7: #{resblock.1} parent=0 // pred_check_branch
    %11 = sbr.rel (0) target = $region9
  $region8: #{resblock.1} parent=0 // pred_region
    _
  $region9: #{resblock.1} parent=0 // pred_fallthru
    _
  // Predicated region
  $region10: #{resblock.1} parent=0 // pred_check
    _
  $region11: #{resblock.1} parent=0 // pred_check_branch
    %13 = sbr.rel (0) target = $region13
  $region12: #{resblock.1} parent=0 // pred_region
    _
  $region13: #{resblock.1} parent=0 // pred_fallthru
    _
  %v14 = vld [vmem:[%s0] sm:$0xff]
  %v15 = vld [vmem:[%s1] sm:$0xff]
  %v16 = vld [vmem:[%s1 + $0x8] sm:$0xff]
  %v17 = vld [vmem:[%s1 + $0x10] sm:$0xff]
  %v18 = vld [vmem:[%s1 + $0x18] sm:$0xff]
  %v19 = vld [vmem:[%s1 + $0x20] sm:$0xff]
  %v20 = vld [vmem:[%s1 + $0x28] sm:$0xff]
  %v21 = vld [vmem:[%s1 + $0x30] sm:$0xff]
  %v22 = vld [vmem:[%s1 + $0x38] sm:$0xff]
  %v23 = vld [vmem:[%s1 + $0x40] sm:$0xff]
  %v24 = vld [vmem:[%s1 + $0x48] sm:$0xff]
  %v25 = vld [vmem:[%s1 + $0x50] sm:$0xff]
  %v26 = vld [vmem:[%s1 + $0x58] sm:$0xff]
  %v27 = vld [vmem:[%s1 + $0x60] sm:$0xff]
  %v28 = vld [vmem:[%s1 + $0x68] sm:$0xff]
  %v29 = vld [vmem:[%s1 + $0x70] sm:$0xff]
  %v30 = vld [vmem:[%s1 + $0x78] sm:$0xff]
  %v31 = vld [vmem:[%s2] sm:$0x1]
  %v33 = vperm.slane %v31, 0
  %35 = vmatpush.msra.mxu0 %v30
  %36 = vmatpush.msra.mxu0 %v29
  %37 = vmatpush.msra.mxu0 %v28
  %38 = vmatpush.msra.mxu0 %v27
  %39 = vmatpush.msra.mxu0 %v26
  %40 = vmatpush.msra.mxu0 %v25
  %41 = vmatpush.msra.mxu0 %v24
  %42 = vmatpush.msra.mxu0 %v23
  %43 = vmatpush.msra.mxu0 %v22
  %44 = vmatpush.msra.mxu0 %v21
  %45 = vmatpush.msra.mxu0 %v20
  %46 = vmatpush.msra.mxu0 %v19
  %47 = vmatpush.msra.mxu0 %v18
  %48 = vmatpush.msra.mxu0 %v17
  %49 = vmatpush.msra.mxu0 %v16
  %50 = vmatpush.msra.mxu0 %v15
  %51 = vmatmul.f32.gmra.mxu0 %v14
  %v52 = vpop.f32.mrf.mxu0
  %v53 = vadd.f32 %v33, %v52
  %54 = vdwg.mxu0
  %v55 = vmul.f32 %v53, 0.2
  %v56 = vmax.f32 %v53, %v55
  %57 = vst [vmem:[%s3] sm:$0xff] %v56
  // Predicated region
  $region14: #{resblock.1} parent=0 // pred_check
    _
  $region15: #{resblock.1} parent=0 // pred_check_branch
    %59 = sbr.rel (0) target = $region17
  $region16: #{resblock.1} parent=0 // pred_region
    _
  $region17: #{resblock.1} parent=0 // pred_fallthru
    _
  // Predicated region
  $region18: #{resblock.1} parent=0 // pred_check
    _
  $region19: #{resblock.1} parent=0 // pred_check_branch
    %61 = sbr.rel (0) target = $region21
  $region20: #{resblock.1} parent=0 // pred_region
    _
  $region21: #{resblock.1} parent=0 // pred_fallthru
    _

</llo_original>
